<compile_context>
chip_gen: v7x
topology: tpu7x:2x2x1
jax: 0.10.0
libtpu: 0.0.40
codegen_flags: <defaults>
</compile_context>

<pallas_src>
import functools

import jax
import jax.numpy as jnp
from jax.experimental import pallas as pl
from jax.experimental.pallas import tpu as pltpu

ALPHA = 0.01
MAX_COLS = 1024                 # lane-dense last dim (multiple of 128)
TARGET_BLOCK_BYTES = 4 << 20    # ~4 MiB per operand per grid step
MIN_PALLAS_BYTES = 512 << 10    # below this, XLA's fused elementwise wins


def _soft_clamp_kernel(x_ref, o_ref, *, alpha):
    x = x_ref[...]
    neg = jnp.minimum(x, 0.0)          # negative part (x < 0)
    over = jnp.maximum(x - 1.0, 0.0)   # overshoot-above-1 part (x > 1)
    # clip(x,0,1) + alpha*(neg+over)  ==  x + (alpha-1)*(neg+over)
    o_ref[...] = x + (alpha - 1.0) * (neg + over)


def _soft_clamp_jnp(x, alpha=ALPHA):
    """Plain fused reference / fallback (exactly the PyTorch forward)."""
    x0 = jnp.minimum(x, 0.0)
    x1 = jnp.maximum(x - 1.0, 0.0)
    return jnp.clip(x, 0.0, 1.0) + alpha * x0 + alpha * x1


def soft_clamp(x, alpha=ALPHA, min_pallas_bytes=MIN_PALLAS_BYTES):
    """Elementwise SoftClamp on an arbitrary-shape array (NCHW or anything)."""
    orig_shape = x.shape
    dtype = x.dtype
    n = x.size
    itemsize = jnp.dtype(dtype).itemsize

    if n == 0:
        return x

    # Tiny or lane-ragged sizes: a Pallas launch (and any pad/slice pass) costs
    # more than the work itself; XLA's fused elementwise is optimal there.
    if n * itemsize < min_pallas_bytes or n % 128 != 0:
        return _soft_clamp_jnp(x, alpha)

    # --- choose a lane-dense slab layout (no padding: cols divides n) -------
    # Sublane packing: 8 rows for f32, 16 for bf16, 32 for int8/fp8.
    packing = max(1, 4 // itemsize)
    sub = 8 * packing

    cols = None
    for c in (MAX_COLS, MAX_COLS // 2, MAX_COLS // 4, 128):
        if n % c == 0 and n // c >= sub:
            cols = c
            break
    if cols is None:
        cols = 128          # n % 128 == 0 is guaranteed here; rows < sub
    rows = n // cols

    # --- block size: byte budget, sublane-aligned, grid >= 2 when possible ---
    if rows < sub:
        block_rows = rows   # block == full array dim (always legal)
    else:
        budget_rows = max(sub, (TARGET_BLOCK_BYTES // (cols * itemsize)) // sub * sub)
        half_rows = max(sub, pl.cdiv(rows, 2 * sub) * sub)   # megacore split
        block_rows = min(budget_rows, half_rows)
    grid = (pl.cdiv(rows, block_rows),)   # last block may be partial -> masked

    x2d = x.reshape(rows, cols)           # no pad: pure (free) reshape

    out2d = pl.pallas_call(
        functools.partial(_soft_clamp_kernel, alpha=float(alpha)),
        out_shape=jax.ShapeDtypeStruct((rows, cols), dtype),
        grid=grid,
        in_specs=[pl.BlockSpec((block_rows, cols), lambda i: (i, 0))],
        out_specs=pl.BlockSpec((block_rows, cols), lambda i: (i, 0)),
        compiler_params=pltpu.CompilerParams(
            dimension_semantics=("parallel",),   # shards across v7x's 2 TCs
            vmem_limit_bytes=32 << 20,           # 2x(4 MiB in + 4 MiB out) fits
        ),
    )(x2d)

    return out2d.reshape(orig_shape)


if __name__ == "__main__":
    key = jax.random.PRNGKey(0)
    k1, k2 = jax.random.split(key)

    # Small NCHW input consistent with the module; scaled so all three regimes
    # (x < 0, 0 <= x <= 1, x > 1) are exercised.
    x_small = jax.random.normal(k1, (2, 4, 16, 16), dtype=jnp.float32) * 2.0
    # Row count chosen to force a partial (masked) last block in the kernel.
    x_partial = jax.random.normal(k2, (2, 4, 24, 16), dtype=jnp.float32) * 2.0

    for x in (x_small, x_partial):
        out = jax.block_until_ready(soft_clamp(x, min_pallas_bytes=0))  # Pallas path
        ref = _soft_clamp_jnp(x)
        assert out.shape == x.shape and out.dtype == x.dtype
        assert jnp.allclose(out, ref, atol=1e-6, rtol=1e-6), "Pallas path mismatch"

    # Default path for tiny inputs: fused jnp fallback (no Pallas launch).
    out_fb = jax.block_until_ready(soft_clamp(x_small))
    assert jnp.allclose(out_fb, _soft_clamp_jnp(x_small), atol=1e-6, rtol=1e-6)

    print("KERNEL_OK")
</pallas_src>

<mosaic_0001>
module attributes {stable_mosaic.version = 11 : i64} {
  func.func @_soft_clamp_kernel(%arg0: i32, %arg1: memref<8x256xf32, #tpu.memory_space<vmem>>, %arg2: memref<8x256xf32, #tpu.memory_space<vmem>>) attributes {dimension_semantics = [#tpu.dimension_semantics<parallel>], iteration_bounds = array<i64: 1>, scalar_prefetch = 0 : i64, scratch_operands = 0 : i64, tpu.core_type = #tpu.core_type<tc>, window_params = [{transform_indices = @transform_0, window_bounds = array<i64: 8, 256>}, {transform_indices = @transform_1, window_bounds = array<i64: 8, 256>}]} {
    %c0 = arith.constant 0 : index
    %c0_0 = arith.constant 0 : index
    %0 = vector.load %arg1[%c0, %c0_0] : memref<8x256xf32, #tpu.memory_space<vmem>>, vector<8x256xf32>
    %cst = arith.constant 0.000000e+00 : f32
    %1 = vector.broadcast %cst : f32 to vector<8x256xf32>
    %2 = arith.minimumf %0, %1 : vector<8x256xf32>
    %cst_1 = arith.constant 1.000000e+00 : f32
    %3 = vector.broadcast %cst_1 : f32 to vector<8x256xf32>
    %4 = arith.subf %0, %3 : vector<8x256xf32>
    %cst_2 = arith.constant 0.000000e+00 : f32
    %5 = vector.broadcast %cst_2 : f32 to vector<8x256xf32>
    %6 = arith.maximumf %4, %5 : vector<8x256xf32>
    %7 = arith.addf %2, %6 : vector<8x256xf32>
    %cst_3 = arith.constant -9.900000e-01 : f32
    %8 = vector.broadcast %cst_3 : f32 to vector<8x256xf32>
    %9 = arith.mulf %8, %7 : vector<8x256xf32>
    %10 = arith.addf %0, %9 : vector<8x256xf32>
    %c0_4 = arith.constant 0 : index
    %c0_5 = arith.constant 0 : index
    %11 = vector.load %arg2[%c0_4, %c0_5] : memref<8x256xf32, #tpu.memory_space<vmem>>, vector<8x256xf32>
    tpu.vector_store %arg2[%c0_4, %c0_5], %10 {strides = array<i32>} : memref<8x256xf32, #tpu.memory_space<vmem>>, vector<8x256xf32>,
    return
  }
  func.func @transform_0(%arg0: i32) -> (i32, i32) {
    %c0_i32 = arith.constant 0 : i32
    %c0_i32_0 = arith.constant 0 : i32
    return %arg0, %c0_i32 : i32, i32
  }
  func.func @transform_1(%arg0: i32) -> (i32, i32) {
    %c0_i32 = arith.constant 0 : i32
    %c0_i32_0 = arith.constant 0 : i32
    return %arg0, %c0_i32 : i32, i32
  }
}

</mosaic_0001>

<llo_original>
// kernel: tpu_custom_call.1
$region0: #{tpu_custom_call.1}
  #allocation0 [shape = 'u32[]', space=smem, size = 0x4, offset = 0x4, fixed_abs, tag = 'smem constant byte address 0x4 - core index']
  #allocation1 [shape = 'u32[144,128]{1,0:T(1,128)}', space=vmem, size = 0x12000, scoped, tag = 'internal scratch']
  %s0 = inlined_call_operand.hbm [shape: f32[8,256], index: 0, kind: input, shape index: {}]
  %s1 = inlined_call_operand.hbm [shape: f32[8,256], index: 1, kind: output, shape index: {}]
  %s2 = sld [smem:[#allocation0]]
  $region18: #{tpu_custom_call.1} parent=0
    _
  %s4 = ssub.s32 1, %s2
  %s5 = scalar_select 0, %s4, %s2
  $region1: #{tpu_custom_call.1} parent=0
    #allocation2 [shape = 'u8[8192]{0}', space=vmem, size = 0x2000, scoped, tag = 'input window, operand 0, single buffered']
    #allocation3 [shape = 's32[1]{0}', space=sflag, size = 0x4, scoped, tag = 'scoped memory for tpu_custom_call.1']
    #allocation4 [shape = 's32[1]{0}', space=sflag, size = 0x4, scoped, tag = 'scoped memory for tpu_custom_call.1']
    #allocation5 [shape = 'u8[8192]{0}', space=vmem, size = 0x2000, scoped, tag = 'output window, operand 0, single buffered']
    %6 = vsyncpa [#allocation3], 0
    %7 = vsyncpa [#allocation4], 0
    // Predicated region
    $region2: #{tpu_custom_call.1} parent=1 // pred_check
      _
    $region3: #{tpu_custom_call.1} parent=1 // pred_check_branch
      %9 = sbr.rel (0) target = $region5
    $region4: #{tpu_custom_call.1} parent=1 // pred_region
      %s11 = ssub.s32 256, 256
      %12 = vsyncadd [#allocation3], %s11
      %s14 = sshll.u32 [#allocation2], 4
      %s15 = int_to_ptr.vmem [resolvable:$true] %s14
      %17 = dma.hbm_to_vmem [thread:$0]  %s0, 256, %s15, [#allocation3]
    $region5: #{tpu_custom_call.1} parent=1 // pred_fallthru
      _
    // Predicated region
    $region6: #{tpu_custom_call.1} parent=1 // pred_check
      _
    $region7: #{tpu_custom_call.1} parent=1 // pred_check_branch
      %19 = sbr.rel (0) target = $region9
    $region8: #{tpu_custom_call.1} parent=1 // pred_region
      %20 = dma.done [#allocation3], 256
    $region9: #{tpu_custom_call.1} parent=1 // pred_fallthru
      _
    %v21 = vld [vmem:[#allocation2] sm:$0xff]
    %v22 = vld [vmem:[#allocation2 + $0x8] sm:$0xff]
    %v23 = vmin.f32 %v21, 0.0
    %v24 = vmin.f32 %v22, 0.0
    %v25 = vsub.f32 %v21, 1.0
    %v26 = vsub.f32 %v22, 1.0
    %v27 = vmax.f32 %v25, 0.0
    %v28 = vmax.f32 %v26, 0.0
    %v29 = vadd.f32 %v23, %v27
    %v30 = vadd.f32 %v24, %v28
    %v31 = vmul.f32 %v29, -0.99
    %v32 = vmul.f32 %v30, -0.99
    %v33 = vadd.f32 %v21, %v31
    %v34 = vadd.f32 %v22, %v32
    %35 = vst [vmem:[#allocation5] sm:$0xff] %v33
    %36 = vst [vmem:[#allocation5 + $0x8] sm:$0xff] %v34
    // Predicated region
    $region10: #{tpu_custom_call.1} parent=1 // pred_check
      _
    $region11: #{tpu_custom_call.1} parent=1 // pred_check_branch
      %38 = sbr.rel (0) target = $region13
    $region12: #{tpu_custom_call.1} parent=1 // pred_region
      %s40 = ssub.s32 256, 256
      %41 = vsyncadd [#allocation4], %s40
      %s43 = sshll.u32 [#allocation5], 4
      %s44 = int_to_ptr.vmem [resolvable:$true] %s43
      %46 = dma.vmem_to_hbm [thread:$0]  %s44, 256, %s1, [#allocation4]
    $region13: #{tpu_custom_call.1} parent=1 // pred_fallthru
      _
    // Predicated region
    $region14: #{tpu_custom_call.1} parent=1 // pred_check
      _
    $region15: #{tpu_custom_call.1} parent=1 // pred_check_branch
      %48 = sbr.rel (0) target = $region17
    $region16: #{tpu_custom_call.1} parent=1 // pred_region
      %49 = dma.done [#allocation4], 256
    $region17: #{tpu_custom_call.1} parent=1 // pred_fallthru
      _
    %50 = vsyncpa [#allocation3], 1
    %51 = vsyncpa [#allocation4], 1

</llo_original>
